<compile_context>
chip_gen: v7x
topology: tpu7x:2x2x1
jax: 0.10.0
libtpu: 0.0.40
codegen_flags: <defaults>
</compile_context>

<pallas_src>
import functools

import jax
import jax.numpy as jnp
from jax.experimental import pallas as pl
from jax.experimental.pallas import tpu as pltpu

HIDDEN = 32
OUT = 4
OUT_PAD = 8          # output rows padded to one f32 sublane tile
LANE = 128           # lane width (batch tile granularity)
TB_CAP = 1024        # max batch tile (lanes); activations stay tiny in VMEM

# Packed-parameter slab layout: (72 rows, 32 lanes), f32.
#   rows 0..31 ("vec" block): col0 = w1 (32,), col1 = b1, col2 = b2,
#                             col3 rows 0..3 = b3 (rest zero)
#   rows 32..63: fc2 weight, torch layout (out, in) = (32, 32)
#   rows 64..71: fc3 weight, torch layout (4, 32) zero-padded to (8, 32)
_ROW_VEC = 0
_ROW_W2 = 32
_ROW_W3 = 64
_PACK_ROWS = 72      # multiple of 8


def _round_up(n, m):
    return ((n + m - 1) // m) * m


def _choose_tile(bp):
    """Pick a batch tile (multiple of 128) that divides bp (bp % 128 == 0)."""
    n = bp // LANE
    max_units = TB_CAP // LANE
    tb_units = 1
    for u in range(min(n, max_units), 0, -1):       # largest divisor <= cap
        if n % u == 0:
            tb_units = u
            break
    # v7x megacore: if the whole batch fit in one step but is big enough,
    # split so the "parallel" grid axis has >= 2 steps (2 TensorCores).
    if n // tb_units < 2 and n >= 4:
        for u in range(n // 2, 0, -1):
            if n % u == 0:
                tb_units = u
                break
    return tb_units * LANE


# ----------------------------------------------------------------------------
# Kernel: full 3-layer MLP for one batch tile, batch on the lane axis.
# ----------------------------------------------------------------------------
def qnet_kernel(x_ref, p_ref, out_ref):
    # Raw observations (any numeric dtype); cast on the VPU (== .float()).
    x = x_ref[...].astype(jnp.float32)                     # (1, tb)

    vec = p_ref[_ROW_VEC:_ROW_VEC + HIDDEN, :]              # (32, 32)
    w1 = vec[:, 0:1]                                        # (32, 1)
    b1 = vec[:, 1:2]                                        # (32, 1)
    b2 = vec[:, 2:3]                                        # (32, 1)
    b3 = vec[:OUT_PAD, 3:4]                                 # (8, 1) rows 4..7 zero
    w2 = p_ref[_ROW_W2:_ROW_W2 + HIDDEN, :]                 # (32, 32) torch (out,in)
    w3 = p_ref[_ROW_W3:_ROW_W3 + OUT_PAD, :]                # (8, 32)  rows 4..7 zero

    # fc1: K=1 contraction == outer product -> pure VPU broadcast FMA + ReLU.
    h1 = jnp.maximum(w1 * x + b1, 0.0)                      # (32, tb)

    # fc2 / fc3 on the MXU with f32 accumulation; batch stays on lanes.
    h2 = jnp.dot(w2, h1, preferred_element_type=jnp.float32) + b2
    h2 = jnp.maximum(h2, 0.0)                               # (32, tb)
    q = jnp.dot(w3, h2, preferred_element_type=jnp.float32) + b3   # (8, tb)

    out_ref[...] = q.astype(out_ref.dtype)                  # unmasked (8, tb) store


# ----------------------------------------------------------------------------
# Wrapper
# ----------------------------------------------------------------------------
def pack_params(params):
    """Pack (w1,b1,w2,b2,w3,b3), weights in torch (out,in) layout, into one slab."""
    w1, b1, w2, b2, w3, b3 = params
    p = jnp.zeros((_PACK_ROWS, HIDDEN), jnp.float32)
    p = p.at[_ROW_VEC:_ROW_VEC + HIDDEN, 0].set(w1.reshape(HIDDEN).astype(jnp.float32))
    p = p.at[_ROW_VEC:_ROW_VEC + HIDDEN, 1].set(b1.reshape(HIDDEN).astype(jnp.float32))
    p = p.at[_ROW_VEC:_ROW_VEC + HIDDEN, 2].set(b2.reshape(HIDDEN).astype(jnp.float32))
    p = p.at[_ROW_VEC:_ROW_VEC + OUT, 3].set(b3.reshape(OUT).astype(jnp.float32))
    p = p.at[_ROW_W2:_ROW_W2 + HIDDEN, :].set(w2.astype(jnp.float32))
    p = p.at[_ROW_W3:_ROW_W3 + OUT, :].set(w3.astype(jnp.float32))
    return p


@functools.partial(jax.jit, static_argnames=("tb",))
def qnet_forward(x, packed_params, *, tb=None):
    """x: (B,) any numeric dtype. Returns (B, 4) float32 Q-values."""
    B = x.shape[0]
    if B == 0:
        return jnp.zeros((0, OUT), jnp.float32)

    if tb is not None:
        assert tb % LANE == 0, "batch tile must be a multiple of 128"
        Bp = _round_up(B, tb)
    else:
        Bp = _round_up(B, LANE)       # pad only to lane granularity
        tb = _choose_tile(Bp)         # divisor of Bp -> no extra padding

    # Batch on the lane axis: (1, Bp).
    xr = x.reshape(1, B)
    if Bp != B:
        xr = jnp.pad(xr, ((0, 0), (0, Bp - B)))

    out = pl.pallas_call(
        qnet_kernel,
        out_shape=jax.ShapeDtypeStruct((OUT_PAD, Bp), jnp.float32),
        grid_spec=pltpu.PrefetchScalarGridSpec(
            num_scalar_prefetch=0,
            grid=(Bp // tb,),
            in_specs=[
                pl.BlockSpec((1, tb), lambda i: (0, i)),               # x, lane-dense
                pl.BlockSpec((_PACK_ROWS, HIDDEN), lambda i: (0, 0)),  # params, VMEM-resident
            ],
            out_specs=pl.BlockSpec((OUT_PAD, tb), lambda i: (0, i)),   # lane-dense output
        ),
        compiler_params=pltpu.CompilerParams(
            dimension_semantics=("parallel",)),
    )(xr, packed_params)

    # Drop the zero-padded output rows / batch columns and restore (B, 4).
    return out[:OUT, :B].T


# ----------------------------------------------------------------------------
# Deterministic parameter init (PyTorch nn.Linear default: U(+/- 1/sqrt(fan_in))).
# Weights in torch layout (out_features, in_features); biases (out_features,).
# ----------------------------------------------------------------------------
def init_params(key):
    def linear(key, fan_in, fan_out):
        kw, kb = jax.random.split(key)
        bound = 1.0 / jnp.sqrt(jnp.float32(fan_in))
        w = jax.random.uniform(kw, (fan_out, fan_in), jnp.float32, -bound, bound)
        b = jax.random.uniform(kb, (fan_out,), jnp.float32, -bound, bound)
        return w, b

    k1, k2, k3 = jax.random.split(key, 3)
    w1, b1 = linear(k1, 1, 32)    # fc1: Linear(1, 32)
    w2, b2 = linear(k2, 32, 32)   # fc2: Linear(32, 32)
    w3, b3 = linear(k3, 32, 4)    # fc3: Linear(32, 4)
    return (w1, b1, w2, b2, w3, b3)


# Pure-JAX reference for a semantics check.
def qnet_reference(x, params):
    w1, b1, w2, b2, w3, b3 = params
    h = x.astype(jnp.float32)[:, None]
    h = jnp.maximum(h @ w1.T + b1, 0.0)
    h = jnp.maximum(h @ w2.T + b2, 0.0)
    return h @ w3.T + b3


if __name__ == "__main__":
    key = jax.random.PRNGKey(0)
    pkey, xkey, xkey2, xkey3 = jax.random.split(key, 4)

    params = init_params(pkey)
    packed = pack_params(params)

    # Observations in the two-step task are small integer states; batch of 8.
    B = 8
    x = jax.random.randint(xkey, (B,), minval=0, maxval=3, dtype=jnp.int32)
    out = jax.block_until_ready(qnet_forward(x, packed))
    ref = qnet_reference(x, params)
    assert out.shape == (B, 4)
    assert jnp.allclose(out, ref, atol=1e-4, rtol=1e-4)

    # Padded-batch path (B not a multiple of the lane granularity).
    B2 = 5
    x2 = jax.random.randint(xkey2, (B2,), minval=0, maxval=3, dtype=jnp.int32)
    out2 = jax.block_until_ready(qnet_forward(x2, packed))
    ref2 = qnet_reference(x2, params)
    assert out2.shape == (B2, 4)
    assert jnp.allclose(out2, ref2, atol=1e-4, rtol=1e-4)

    # Multi-step grid path (explicit tile -> 3 grid steps), float inputs.
    B3 = 300
    x3 = jax.random.uniform(xkey3, (B3,), jnp.float32, 0.0, 3.0)
    out3 = jax.block_until_ready(qnet_forward(x3, packed, tb=128))
    ref3 = qnet_reference(x3, params)
    assert out3.shape == (B3, 4)
    assert jnp.allclose(out3, ref3, atol=1e-4, rtol=1e-4)

    print("KERNEL_OK")
</pallas_src>

<mosaic_0001>
module attributes {stable_mosaic.version = 11 : i64} {
  func.func @qnet_kernel(%arg0: i32, %arg1: memref<1x128xi32, #tpu.memory_space<vmem>>, %arg2: memref<72x32xf32, #tpu.memory_space<vmem>>, %arg3: memref<8x128xf32, #tpu.memory_space<vmem>>) attributes {dimension_semantics = [#tpu.dimension_semantics<parallel>], iteration_bounds = array<i64: 1>, scalar_prefetch = 0 : i64, scratch_operands = 0 : i64, tpu.core_type = #tpu.core_type<tc>, window_params = [{transform_indices = @transform_0, window_bounds = array<i64: 1, 128>}, {pipeline_mode = #tpu.pipeline_mode<synchronous>, transform_indices = @transform_1, window_bounds = array<i64: 72, 32>}, {transform_indices = @transform_2, window_bounds = array<i64: 8, 128>}]} {
    %c0 = arith.constant 0 : index
    %c0_0 = arith.constant 0 : index
    %0 = vector.load %arg1[%c0, %c0_0] : memref<1x128xi32, #tpu.memory_space<vmem>>, vector<1x128xi32>
    %1 = arith.sitofp %0 : vector<1x128xi32> to vector<1x128xf32>
    %c0_1 = arith.constant 0 : index
    %c0_2 = arith.constant 0 : index
    %2 = vector.load %arg2[%c0_1, %c0_2] : memref<72x32xf32, #tpu.memory_space<vmem>>, vector<32x32xf32>
    %3 = vector.extract_strided_slice %2 {offsets = [0, 0], sizes = [32, 1], strides = [1, 1]} : vector<32x32xf32> to vector<32x1xf32>
    %4 = vector.extract_strided_slice %2 {offsets = [0, 1], sizes = [32, 1], strides = [1, 1]} : vector<32x32xf32> to vector<32x1xf32>
    %5 = vector.extract_strided_slice %2 {offsets = [0, 2], sizes = [32, 1], strides = [1, 1]} : vector<32x32xf32> to vector<32x1xf32>
    %6 = vector.extract_strided_slice %2 {offsets = [0, 3], sizes = [8, 1], strides = [1, 1]} : vector<32x32xf32> to vector<8x1xf32>
    %c32 = arith.constant 32 : index
    %c0_3 = arith.constant 0 : index
    %7 = vector.load %arg2[%c32, %c0_3] : memref<72x32xf32, #tpu.memory_space<vmem>>, vector<32x32xf32>
    %c64 = arith.constant 64 : index
    %c0_4 = arith.constant 0 : index
    %8 = vector.load %arg2[%c64, %c0_4] : memref<72x32xf32, #tpu.memory_space<vmem>>, vector<8x32xf32>
    %9 = vector.broadcast %3 : vector<32x1xf32> to vector<32x128xf32>
    %10 = vector.broadcast %1 : vector<1x128xf32> to vector<32x128xf32>
    %11 = arith.mulf %9, %10 : vector<32x128xf32>
    %12 = vector.broadcast %4 : vector<32x1xf32> to vector<32x128xf32>
    %13 = arith.addf %11, %12 : vector<32x128xf32>
    %cst = arith.constant 0.000000e+00 : f32
    %14 = vector.broadcast %cst : f32 to vector<32x128xf32>
    %15 = arith.maximumf %13, %14 : vector<32x128xf32>
    %cst_5 = arith.constant dense<0.000000e+00> : vector<32x128xf32>
    %16 = tpu.matmul %7, %15, %cst_5 {dimension_numbers = #tpu.dot_dimension_numbers<[1], [0], [0], [1], [0, 0, 1, 1], [], []>} : vector<32x32xf32>, vector<32x128xf32>, vector<32x128xf32> -> vector<32x128xf32>
    %17 = vector.broadcast %5 : vector<32x1xf32> to vector<32x128xf32>
    %18 = arith.addf %16, %17 : vector<32x128xf32>
    %cst_6 = arith.constant 0.000000e+00 : f32
    %19 = vector.broadcast %cst_6 : f32 to vector<32x128xf32>
    %20 = arith.maximumf %18, %19 : vector<32x128xf32>
    %cst_7 = arith.constant dense<0.000000e+00> : vector<8x128xf32>
    %21 = tpu.matmul %8, %20, %cst_7 {dimension_numbers = #tpu.dot_dimension_numbers<[1], [0], [0], [1], [0, 0, 1, 1], [], []>} : vector<8x32xf32>, vector<32x128xf32>, vector<8x128xf32> -> vector<8x128xf32>
    %22 = vector.broadcast %6 : vector<8x1xf32> to vector<8x128xf32>
    %23 = arith.addf %21, %22 : vector<8x128xf32>
    %c0_8 = arith.constant 0 : index
    %c0_9 = arith.constant 0 : index
    %24 = vector.load %arg3[%c0_8, %c0_9] : memref<8x128xf32, #tpu.memory_space<vmem>>, vector<8x128xf32>
    tpu.vector_store %arg3[%c0_8, %c0_9], %23 {strides = array<i32>} : memref<8x128xf32, #tpu.memory_space<vmem>>, vector<8x128xf32>,
    return
  }
  func.func @transform_0(%arg0: i32) -> (i32, i32) {
    %c0_i32 = arith.constant 0 : i32
    %c0_i32_0 = arith.constant 0 : i32
    return %c0_i32, %arg0 : i32, i32
  }
  func.func @transform_1(%arg0: i32) -> (i32, i32) {
    %c0_i32 = arith.constant 0 : i32
    %c0_i32_0 = arith.constant 0 : i32
    %c0_i32_1 = arith.constant 0 : i32
    return %c0_i32, %c0_i32_0 : i32, i32
  }
  func.func @transform_2(%arg0: i32) -> (i32, i32) {
    %c0_i32 = arith.constant 0 : i32
    %c0_i32_0 = arith.constant 0 : i32
    return %c0_i32, %arg0 : i32, i32
  }
}

</mosaic_0001>

<llo_original>
// kernel: qnet_forward.1
$region0: #{qnet_forward.1}
  #allocation0 [shape = 'u32[]', space=smem, size = 0x4, offset = 0x4, fixed_abs, tag = 'smem constant byte address 0x4 - core index']
  #allocation1 [shape = 'u32[144,128]{1,0:T(1,128)}', space=vmem, size = 0x12000, scoped, tag = 'internal scratch']
  %s0 = inlined_call_operand.vmem [shape: s32[1,128], index: 0, kind: input, shape index: {}]
  %s1 = inlined_call_operand.vmem [shape: f32[72,32], index: 1, kind: input, shape index: {}]
  %s2 = inlined_call_operand.vmem [shape: f32[8,128], index: 2, kind: output, shape index: {}]
  %s3 = sld [smem:[#allocation0]]
  $region18: #{qnet_forward.1} parent=0
    _
  %s5 = ssub.s32 1, %s3
  %s6 = scalar_select 0, %s5, %s3
  // Predicated region
  $region2: #{qnet_forward.1} parent=0 // pred_check
    _
  $region3: #{qnet_forward.1} parent=0 // pred_check_branch
    %8 = sbr.rel (0) target = $region5
  $region4: #{qnet_forward.1} parent=0 // pred_region
    _
  $region5: #{qnet_forward.1} parent=0 // pred_fallthru
    _
  // Predicated region
  $region6: #{qnet_forward.1} parent=0 // pred_check
    _
  $region7: #{qnet_forward.1} parent=0 // pred_check_branch
    %10 = sbr.rel (0) target = $region9
  $region8: #{qnet_forward.1} parent=0 // pred_region
    _
  $region9: #{qnet_forward.1} parent=0 // pred_fallthru
    _
  %v11 = vld [vmem:[%s0] sm:$0x1]
  %v12 = vcvt.s32.f32 %v11
  %v13 = vld [vmem:[%s1] sm:$0xff]
  %v14 = vld [vmem:[%s1 + $0x8] sm:$0xff]
  %v15 = vld [vmem:[%s1 + $0x10] sm:$0xff]
  %v16 = vld [vmem:[%s1 + $0x18] sm:$0xff]
  %v17 = vld [vmem:[%s1 + $0x20] sm:$0xff]
  %v18 = vld [vmem:[%s1 + $0x28] sm:$0xff]
  %v19 = vld [vmem:[%s1 + $0x30] sm:$0xff]
  %v20 = vld [vmem:[%s1 + $0x38] sm:$0xff]
  %v21 = vld [vmem:[%s1 + $0x40] sm:$0xff]
  %23 = vset.pattern.permute.xlu0 0
  %24 = vperm.xlu0 %23, %v13
  %v25 = vpop.permute.xlu0 %24
  %28 = vset.pattern.permute.xlu0 0
  %29 = vperm.xlu0 %28, %v14
  %v30 = vpop.permute.xlu0 %29
  %33 = vset.pattern.permute.xlu0 0
  %34 = vperm.xlu0 %33, %v15
  %v35 = vpop.permute.xlu0 %34
  %38 = vset.pattern.permute.xlu0 0
  %39 = vperm.xlu0 %38, %v16
  %v40 = vpop.permute.xlu0 %39
  %v43 = vlaneseq
  %v44 = vshrl.u32 %v43, 7
  %v45 = vsub.s32 0, %v44
  %v46 = vrot.slane %v12, %v45
  %v48 = vmul.f32 %v25, %v46
  %v49 = vmul.f32 %v30, %v46
  %v50 = vmul.f32 %v35, %v46
  %v51 = vmul.f32 %v40, %v46
  %52 = vset.pattern.permute.xlu0 1
  %53 = vperm.xlu0 %52, %v13
  %v54 = vpop.permute.xlu0 %53
  %56 = vset.pattern.permute.xlu0 1
  %57 = vperm.xlu0 %56, %v14
  %v58 = vpop.permute.xlu0 %57
  %60 = vset.pattern.permute.xlu0 1
  %61 = vperm.xlu0 %60, %v15
  %v62 = vpop.permute.xlu0 %61
  %64 = vset.pattern.permute.xlu0 1
  %65 = vperm.xlu0 %64, %v16
  %v66 = vpop.permute.xlu0 %65
  %v68 = vadd.f32 %v48, %v54
  %v69 = vadd.f32 %v49, %v58
  %v70 = vadd.f32 %v50, %v62
  %v71 = vadd.f32 %v51, %v66
  %v72 = vmax.f32 %v68, 0.0
  %v73 = vmax.f32 %v69, 0.0
  %v74 = vmax.f32 %v70, 0.0
  %v75 = vmax.f32 %v71, 0.0
  %76 = vset.pattern.permute.xlu0 2
  %77 = vperm.xlu0 %76, %v13
  %v78 = vpop.permute.xlu0 %77
  %80 = vset.pattern.permute.xlu0 2
  %81 = vperm.xlu0 %80, %v14
  %v82 = vpop.permute.xlu0 %81
  %84 = vset.pattern.permute.xlu0 2
  %85 = vperm.xlu0 %84, %v15
  %v86 = vpop.permute.xlu0 %85
  %88 = vset.pattern.permute.xlu0 2
  %89 = vperm.xlu0 %88, %v16
  %v90 = vpop.permute.xlu0 %89
  %vm92 = vcmask 261120
  %v94 = vsel %vm92, %v17, 0
  %v97 = vsel %vm92, %v18, 0
  %v100 = vsel %vm92, %v19, 0
  %v103 = vsel %vm92, %v20, 0
  %105 = vmatprep.subr.mxu0 0.0
  %106 = vmatpush1.msra.mxu0 %v72
  %107 = vmatprep.subr.mxu0 0.0
  %108 = vmatpush1.msra.mxu0 %v73
  %109 = vmatprep.subr.mxu0 0.0
  %110 = vmatpush1.msra.mxu0 %v74
  %111 = vmatprep.subr.mxu0 0.0
  %112 = vmatpush1.msra.mxu0 %v75
  %113 = vmatprep.subr.mxu0 0.0
  %114 = vmatpush1.msra.mxu0 0.0
  %115 = vmatprep.subr.mxu0 0.0
  %116 = vmatpush1.msra.mxu0 0.0
  %117 = vmatprep.subr.mxu0 0.0
  %118 = vmatpush1.msra.mxu0 0.0
  %119 = vmatprep.subr.mxu0 0.0
  %120 = vmatpush1.msra.mxu0 0.0
  %121 = vmatprep.subr.mxu0 0.0
  %122 = vmatpush1.msra.mxu0 0.0
  %123 = vmatprep.subr.mxu0 0.0
  %124 = vmatpush1.msra.mxu0 0.0
  %125 = vmatprep.subr.mxu0 0.0
  %126 = vmatpush1.msra.mxu0 0.0
  %127 = vmatprep.subr.mxu0 0.0
  %128 = vmatpush1.msra.mxu0 0.0
  %129 = vmatprep.subr.mxu0 0.0
  %130 = vmatpush1.msra.mxu0 0.0
  %131 = vmatprep.subr.mxu0 0.0
  %132 = vmatpush1.msra.mxu0 0.0
  %133 = vmatprep.subr.mxu0 0.0
  %134 = vmatpush1.msra.mxu0 0.0
  %135 = vmatprep.subr.mxu0 0.0
  %136 = vmatpush1.msra.mxu0 0.0
  %137 = vmatprep.subr.mxu0 0.0
  %138 = vmatpush1.msra.mxu0 0.0
  %139 = vmatprep.subr.mxu0 0.0
  %140 = vmatpush1.msra.mxu0 0.0
  %141 = vmatprep.subr.mxu0 0.0
  %142 = vmatpush1.msra.mxu0 0.0
  %143 = vmatprep.subr.mxu0 0.0
  %144 = vmatpush1.msra.mxu0 0.0
  %145 = vmatprep.subr.mxu0 0.0
  %146 = vmatpush1.msra.mxu0 0.0
  %147 = vmatprep.subr.mxu0 0.0
  %148 = vmatpush1.msra.mxu0 0.0
  %149 = vmatprep.subr.mxu0 0.0
  %150 = vmatpush1.msra.mxu0 0.0
  %151 = vmatprep.subr.mxu0 0.0
  %152 = vmatpush1.msra.mxu0 0.0
  %153 = vmatprep.subr.mxu0 0.0
  %154 = vmatpush1.msra.mxu0 0.0
  %155 = vmatprep.subr.mxu0 0.0
  %156 = vmatpush1.msra.mxu0 0.0
  %157 = vmatprep.subr.mxu0 0.0
  %158 = vmatpush1.msra.mxu0 0.0
  %159 = vmatprep.subr.mxu0 0.0
  %160 = vmatpush1.msra.mxu0 0.0
  %161 = vmatprep.subr.mxu0 0.0
  %162 = vmatpush1.msra.mxu0 0.0
  %163 = vmatprep.subr.mxu0 0.0
  %164 = vmatpush1.msra.mxu0 0.0
  %165 = vmatprep.subr.mxu0 0.0
  %166 = vmatpush1.msra.mxu0 0.0
  %167 = vmatprep.subr.mxu0 0.0
  %168 = vmatpush1.msra.mxu0 0.0
  %169 = vmatprep.mubr.f32.mxu0 0.0
  %170 = vmatmul.mubr.f32.gmra.mrb[0].mxu0 %v94
  %v171 = vpop.f32.mrb[0].mxu0
  %v172 = vadd.f32 %v78, %v171
  %v173 = vpop.f32.mrb[0].mxu0
  %174 = vmatprep.mubr.f32.mxu0 0.0
  %175 = vmatmul.mubr.f32.gmra.mrb[0].mxu0 %v97
  %v176 = vpop.f32.mrb[0].mxu0
  %v177 = vadd.f32 %v82, %v176
  %v178 = vpop.f32.mrb[0].mxu0
  %179 = vmatprep.mubr.f32.mxu0 0.0
  %180 = vmatmul.mubr.f32.gmra.mrb[0].mxu0 %v100
  %v181 = vpop.f32.mrb[0].mxu0
  %v182 = vadd.f32 %v86, %v181
  %v183 = vpop.f32.mrb[0].mxu0
  %184 = vmatprep.mubr.f32.mxu0 0.0
  %185 = vmatmul.mubr.f32.gmra.mrb[0].mxu0 %v103
  %v186 = vpop.f32.mrb[0].mxu0
  %v187 = vadd.f32 %v90, %v186
  %v188 = vpop.f32.mrb[0].mxu0
  %189 = vdwg.mxu0
  %v190 = vmax.f32 %v172, 0.0
  %v191 = vmax.f32 %v177, 0.0
  %v192 = vmax.f32 %v182, 0.0
  %v193 = vmax.f32 %v187, 0.0
  %194 = vset.pattern.permute.xlu0 3
  %195 = vperm.xlu0 %194, %v13
  %v196 = vpop.permute.xlu0 %195
  %v199 = vsel %vm92, %v21, 0
  %201 = vmatprep.subr.mxu0 0.0
  %202 = vmatpush1.msra.mxu0 %v190
  %203 = vmatprep.subr.mxu0 0.0
  %204 = vmatpush1.msra.mxu0 %v191
  %205 = vmatprep.subr.mxu0 0.0
  %206 = vmatpush1.msra.mxu0 %v192
  %207 = vmatprep.subr.mxu0 0.0
  %208 = vmatpush1.msra.mxu0 %v193
  %209 = vmatprep.subr.mxu0 0.0
  %210 = vmatpush1.msra.mxu0 0.0
  %211 = vmatprep.subr.mxu0 0.0
  %212 = vmatpush1.msra.mxu0 0.0
  %213 = vmatprep.subr.mxu0 0.0
  %214 = vmatpush1.msra.mxu0 0.0
  %215 = vmatprep.subr.mxu0 0.0
  %216 = vmatpush1.msra.mxu0 0.0
  %217 = vmatprep.subr.mxu0 0.0
  %218 = vmatpush1.msra.mxu0 0.0
  %219 = vmatprep.subr.mxu0 0.0
  %220 = vmatpush1.msra.mxu0 0.0
  %221 = vmatprep.subr.mxu0 0.0
  %222 = vmatpush1.msra.mxu0 0.0
  %223 = vmatprep.subr.mxu0 0.0
  %224 = vmatpush1.msra.mxu0 0.0
  %225 = vmatprep.subr.mxu0 0.0
  %226 = vmatpush1.msra.mxu0 0.0
  %227 = vmatprep.subr.mxu0 0.0
  %228 = vmatpush1.msra.mxu0 0.0
  %229 = vmatprep.subr.mxu0 0.0
  %230 = vmatpush1.msra.mxu0 0.0
  %231 = vmatprep.subr.mxu0 0.0
  %232 = vmatpush1.msra.mxu0 0.0
  %233 = vmatprep.subr.mxu0 0.0
  %234 = vmatpush1.msra.mxu0 0.0
  %235 = vmatprep.subr.mxu0 0.0
  %236 = vmatpush1.msra.mxu0 0.0
  %237 = vmatprep.subr.mxu0 0.0
  %238 = vmatpush1.msra.mxu0 0.0
  %239 = vmatprep.subr.mxu0 0.0
  %240 = vmatpush1.msra.mxu0 0.0
  %241 = vmatprep.subr.mxu0 0.0
  %242 = vmatpush1.msra.mxu0 0.0
  %243 = vmatprep.subr.mxu0 0.0
  %244 = vmatpush1.msra.mxu0 0.0
  %245 = vmatprep.subr.mxu0 0.0
  %246 = vmatpush1.msra.mxu0 0.0
  %247 = vmatprep.subr.mxu0 0.0
  %248 = vmatpush1.msra.mxu0 0.0
  %249 = vmatprep.subr.mxu0 0.0
  %250 = vmatpush1.msra.mxu0 0.0
  %251 = vmatprep.subr.mxu0 0.0
  %252 = vmatpush1.msra.mxu0 0.0
  %253 = vmatprep.subr.mxu0 0.0
  %254 = vmatpush1.msra.mxu0 0.0
  %255 = vmatprep.subr.mxu0 0.0
  %256 = vmatpush1.msra.mxu0 0.0
  %257 = vmatprep.subr.mxu0 0.0
  %258 = vmatpush1.msra.mxu0 0.0
  %259 = vmatprep.subr.mxu0 0.0
  %260 = vmatpush1.msra.mxu0 0.0
  %261 = vmatprep.subr.mxu0 0.0
  %262 = vmatpush1.msra.mxu0 0.0
  %263 = vmatprep.subr.mxu0 0.0
  %264 = vmatpush1.msra.mxu0 0.0
  %265 = vmatprep.mubr.f32.mxu0 0.0
  %266 = vmatmul.mubr.f32.gmra.mrb[0].mxu0 %v199
  %v267 = vpop.f32.mrb[0].mxu0
  %v268 = vadd.f32 %v196, %v267
  %v269 = vpop.f32.mrb[0].mxu0
  %270 = vdwg.mxu0
  %271 = vst [vmem:[%s2] sm:$0xff] %v268
  // Predicated region
  $region10: #{qnet_forward.1} parent=0 // pred_check
    _
  $region11: #{qnet_forward.1} parent=0 // pred_check_branch
    %273 = sbr.rel (0) target = $region13
  $region12: #{qnet_forward.1} parent=0 // pred_region
    _
  $region13: #{qnet_forward.1} parent=0 // pred_fallthru
    _
  // Predicated region
  $region14: #{qnet_forward.1} parent=0 // pred_check
    _
  $region15: #{qnet_forward.1} parent=0 // pred_check_branch
    %275 = sbr.rel (0) target = $region17
  $region16: #{qnet_forward.1} parent=0 // pred_region
    _
  $region17: #{qnet_forward.1} parent=0 // pred_fallthru
    _

</llo_original>
